<compile_context>
chip_gen: v7x
topology: tpu7x:2x2x1
jax: 0.10.0
libtpu: 0.0.40
codegen_flags: <defaults>
</compile_context>

<pallas_src>
import math
import jax
import jax.numpy as jnp
from jax.experimental import pallas as pl
from jax.experimental.pallas import tpu as pltpu


def _qlinear_kernel(params_ref, x_ref, w_ref, b_ref, o_ref, acc_ref):
    """Computes one (tm, tn) output tile, accumulating over the K grid axis.

    params_ref (SMEM, f32[8]):
      [0] 1/input_scale
      [1] in_lo  = -input_zero_point          (lower clip bound of q - zp)
      [2] in_hi  = 255 - input_zero_point     (upper clip bound of q - zp)
      [3] input_scale * weight_scale          (applied once to the accumulator)
      [4] 1/output_scale
      [5] out_lo = -output_zero_point
      [6] out_hi = 255 - output_zero_point
      [7] output_scale
    x_ref: (tm, tk) f32 raw activations
    w_ref: (tk, tn) bf16 integer-valued pre-quantized weight (wq - w_zp)
    b_ref: (1, tn)  f32 bias (zeros when the module has bias=None)
    """
    k = pl.program_id(2)

    @pl.when(k == 0)
    def _():
        acc_ref[...] = jnp.zeros_like(acc_ref)

    # Activation fake-quant (quint8), zero point folded into the clip bounds:
    #   (q - zp) = clamp(round(x / s_in), -zp, 255 - zp)
    # Integer-valued in [-255, 255] -> exactly representable in bf16 -> full-rate MXU.
    xq = jnp.clip(jnp.round(x_ref[...] * params_ref[0]), params_ref[1], params_ref[2])

    acc_ref[...] += jnp.dot(
        xq.astype(jnp.bfloat16), w_ref[...], preferred_element_type=jnp.float32
    )

    @pl.when(k == pl.num_programs(2) - 1)
    def _():
        # Apply the factored-out input*weight scale once, add bias (epilogue only).
        out = acc_ref[...] * params_ref[3] + b_ref[...]
        # Output fake-quant (quint8); store its dequantized representation.
        oq = jnp.clip(jnp.round(out * params_ref[4]), params_ref[5], params_ref[6])
        o_ref[...] = (oq * params_ref[7]).astype(o_ref.dtype)


def _round_up(v, m):
    return ((v + m - 1) // m) * m


def quantized_linear(x, weight, bias=None, *,
                     input_scale=1.0, input_zero_point=0,
                     weight_scale=1.0, weight_zero_point=0,
                     output_scale=1.0, output_zero_point=0,
                     tm=256, tn=256, tk=512):
    """x: (B, K) f32, weight: (N, K) f32 (PyTorch layout), bias: (N,) or None.

    Returns (B, N) f32 = dequantized values of the quint8 output tensor.
    """
    B, K = x.shape
    N, K2 = weight.shape
    assert K == K2

    x = x.astype(jnp.float32)
    weight = weight.astype(jnp.float32)

    in_zp = float(input_zero_point)
    w_zp = float(weight_zero_point)
    out_zp = float(output_zero_point)

    # --- weight fake-quant hoisted out of the kernel (one pass, plain XLA) ---
    # qint8: (q - zp) = clamp(round(w / s_w), -128 - zp, 127 - zp); integer
    # valued (|v| <= 255), exactly representable in bf16. The kernel applies
    # s_in * s_w once to the accumulator.
    w_int = jnp.clip(jnp.round(weight / weight_scale), -128.0 - w_zp, 127.0 - w_zp)
    w_int = w_int.T.astype(jnp.bfloat16)          # (K, N): canonical MXU layout

    if bias is None:
        bias = jnp.zeros((N,), jnp.float32)
    bias2d = bias.reshape(1, N).astype(jnp.float32)

    # --- tile sizes: clamp to the (padded) problem, respect (8,128) tiling ---
    tm = min(tm, _round_up(B, 8))
    tn = min(tn, _round_up(N, 128))
    tk = min(tk, _round_up(K, 128))
    Mp, Np, Kp = _round_up(B, tm), _round_up(N, tn), _round_up(K, tk)

    # Zero padding along K is exact: padded weight rows are exactly 0, so they
    # contribute 0 to every dot product regardless of what the padded x
    # entries quantize to. Padded M/N rows/cols are sliced off at the end.
    xp = jnp.pad(x, ((0, Mp - B), (0, Kp - K)))
    wp = jnp.pad(w_int, ((0, Kp - K), (0, Np - N)))
    bp = jnp.pad(bias2d, ((0, 0), (0, Np - N)))

    # Zero points are carried as f32 scalars (exact for the int8/uint8 range).
    params = jnp.array(
        [1.0 / float(input_scale), -in_zp, 255.0 - in_zp,
         float(input_scale) * float(weight_scale),
         1.0 / float(output_scale), -out_zp, 255.0 - out_zp,
         float(output_scale)],
        dtype=jnp.float32,
    )

    grid = (Mp // tm, Np // tn, Kp // tk)

    out = pl.pallas_call(
        _qlinear_kernel,
        out_shape=jax.ShapeDtypeStruct((Mp, Np), jnp.float32),
        grid=grid,
        in_specs=[
            pl.BlockSpec(memory_space=pltpu.MemorySpace.SMEM),    # params
            pl.BlockSpec((tm, tk), lambda i, j, k: (i, k)),       # x       (f32)
            pl.BlockSpec((tk, tn), lambda i, j, k: (k, j)),       # weight  (bf16, K x N)
            pl.BlockSpec((1, tn), lambda i, j, k: (0, j)),        # bias    (f32)
        ],
        out_specs=pl.BlockSpec((tm, tn), lambda i, j, k: (i, j)),
        scratch_shapes=[pltpu.VMEM((tm, tn), jnp.float32)],
        compiler_params=pltpu.CompilerParams(
            dimension_semantics=("parallel", "parallel", "arbitrary"),
            vmem_limit_bytes=64 * 1024 * 1024,
        ),
        cost_estimate=pl.CostEstimate(
            flops=2 * Mp * Np * Kp,
            transcendentals=0,
            bytes_accessed=4 * Mp * Kp + 2 * Kp * Np + 4 * Mp * Np,
        ),
    )(params, xp, wp, bp)

    return out[:B, :N]


if __name__ == "__main__":
    # Small shapes consistent with the module: batch=8, in_features=32, out_features=16
    B, IN, OUT = 8, 32, 16

    key = jax.random.PRNGKey(0)
    kx, kw, kb = jax.random.split(key, 3)

    # Deterministic init mirroring the module's nn.Linear-style init:
    #   kaiming_uniform_(a=sqrt(5)) -> U(-1/sqrt(fan_in), 1/sqrt(fan_in))
    bound = 1.0 / math.sqrt(IN)
    weight = jax.random.uniform(kw, (OUT, IN), jnp.float32, -bound, bound)
    bias = jax.random.uniform(kb, (OUT,), jnp.float32, -bound, bound)
    x = jax.random.normal(kx, (B, IN), jnp.float32)

    # input/weight scale=1.0, zero_point=0 as set in the module's __init__.
    # TODO(synk): the PyTorch module never defines self.output_scale /
    # self.output_zero_point in __init__ (its forward would raise AttributeError);
    # we use output_scale=1.0, output_zero_point=0 deterministically here.
    out = quantized_linear(
        x, weight, bias,
        input_scale=1.0, input_zero_point=0,
        weight_scale=1.0, weight_zero_point=0,
        output_scale=1.0, output_zero_point=0,
    )
    jax.block_until_ready(out)

    # Pure-JAX reference with the same fake-quant math.
    def ref(x, w, b):
        xd = (jnp.clip(jnp.round(x / 1.0) + 0, 0, 255) - 0) * 1.0
        wd = (jnp.clip(jnp.round(w / 1.0) + 0, -128, 127) - 0) * 1.0
        o = xd @ wd.T + b
        return (jnp.clip(jnp.round(o / 1.0) + 0, 0, 255) - 0) * 1.0

    expected = ref(x, weight, bias)
    assert out.shape == (B, OUT)
    assert jnp.allclose(out, expected, atol=1e-5), "mismatch vs reference"
    print("KERNEL_OK")
</pallas_src>

<mosaic_0001>
module attributes {stable_mosaic.version = 11 : i64} {
  func.func @_qlinear_kernel(%arg0: i32, %arg1: i32, %arg2: i32, %arg3: memref<8xf32, #tpu.memory_space<smem>>, %arg4: memref<8x128xf32, #tpu.memory_space<vmem>>, %arg5: memref<128x128xbf16, #tpu.memory_space<vmem>>, %arg6: memref<1x128xf32, #tpu.memory_space<vmem>>, %arg7: memref<8x128xf32, #tpu.memory_space<vmem>>, %arg8: memref<8x128xf32, #tpu.memory_space<vmem>>) attributes {dimension_semantics = [#tpu.dimension_semantics<parallel>, #tpu.dimension_semantics<parallel>, #tpu.dimension_semantics<arbitrary>], iteration_bounds = array<i64: 1, 1, 1>, scalar_prefetch = 0 : i64, scratch_operands = 1 : i64, tpu.core_type = #tpu.core_type<tc>, window_params = [{transform_indices = @transform_0, window_bounds = array<i64: 8>}, {transform_indices = @transform_1, window_bounds = array<i64: 8, 128>}, {transform_indices = @transform_2, window_bounds = array<i64: 128, 128>}, {transform_indices = @transform_3, window_bounds = array<i64: 1, 128>}, {transform_indices = @transform_4, window_bounds = array<i64: 8, 128>}]} {
    %c0_i32 = arith.constant 0 : i32
    %0 = arith.cmpi eq, %arg2, %c0_i32 : i32
    %1 = arith.extui %0 : i1 to i32
    %c0_i32_0 = arith.constant 0 : i32
    %2 = arith.cmpi ne, %1, %c0_i32_0 : i32
    scf.if %2 {
      %cst_11 = arith.constant 0.000000e+00 : f32
      %23 = vector.broadcast %cst_11 : f32 to vector<8x128xf32>
      %c0_12 = arith.constant 0 : index
      %c0_13 = arith.constant 0 : index
      %24 = vector.load %arg8[%c0_12, %c0_13] : memref<8x128xf32, #tpu.memory_space<vmem>>, vector<8x128xf32>
      tpu.vector_store %arg8[%c0_12, %c0_13], %23 {strides = array<i32>} : memref<8x128xf32, #tpu.memory_space<vmem>>, vector<8x128xf32>,
    } else {
    }
    %c0 = arith.constant 0 : index
    %c0_1 = arith.constant 0 : index
    %3 = vector.load %arg4[%c0, %c0_1] : memref<8x128xf32, #tpu.memory_space<vmem>>, vector<8x128xf32>
    %c0_2 = arith.constant 0 : index
    %4 = memref.load %arg3[%c0_2] : memref<8xf32, #tpu.memory_space<smem>>
    %5 = vector.broadcast %4 : f32 to vector<8x128xf32>
    %6 = arith.mulf %3, %5 : vector<8x128xf32>
    %7 = math.roundeven %6 : vector<8x128xf32>
    %c1 = arith.constant 1 : index
    %8 = memref.load %arg3[%c1] : memref<8xf32, #tpu.memory_space<smem>>
    %c2 = arith.constant 2 : index
    %9 = memref.load %arg3[%c2] : memref<8xf32, #tpu.memory_space<smem>>
    %10 = vector.broadcast %8 : f32 to vector<8x128xf32>
    %11 = arith.maximumf %10, %7 : vector<8x128xf32>
    %12 = vector.broadcast %9 : f32 to vector<8x128xf32>
    %13 = arith.minimumf %12, %11 : vector<8x128xf32>
    %c0_3 = arith.constant 0 : index
    %c0_4 = arith.constant 0 : index
    %14 = vector.load %arg8[%c0_3, %c0_4] : memref<8x128xf32, #tpu.memory_space<vmem>>, vector<8x128xf32>
    %15 = arith.truncf %13 : vector<8x128xf32> to vector<8x128xbf16>
    %c0_5 = arith.constant 0 : index
    %c0_6 = arith.constant 0 : index
    %16 = vector.load %arg5[%c0_5, %c0_6] : memref<128x128xbf16, #tpu.memory_space<vmem>>, vector<128x128xbf16>
    %cst = arith.constant dense<0.000000e+00> : vector<8x128xf32>
    %17 = tpu.matmul %15, %16, %cst {dimension_numbers = #tpu.dot_dimension_numbers<[1], [0], [0], [1], [0, 0, 1, 1], [], []>} : vector<8x128xbf16>, vector<128x128xbf16>, vector<8x128xf32> -> vector<8x128xf32>
    %18 = arith.addf %14, %17 : vector<8x128xf32>
    %c0_7 = arith.constant 0 : index
    %c0_8 = arith.constant 0 : index
    %19 = vector.load %arg8[%c0_7, %c0_8] : memref<8x128xf32, #tpu.memory_space<vmem>>, vector<8x128xf32>
    tpu.vector_store %arg8[%c0_7, %c0_8], %18 {strides = array<i32>} : memref<8x128xf32, #tpu.memory_space<vmem>>, vector<8x128xf32>,
    %c0_i32_9 = arith.constant 0 : i32
    %20 = arith.cmpi eq, %arg2, %c0_i32_9 : i32
    %21 = arith.extui %20 : i1 to i32
    %c0_i32_10 = arith.constant 0 : i32
    %22 = arith.cmpi ne, %21, %c0_i32_10 : i32
    scf.if %22 {
      %c0_11 = arith.constant 0 : index
      %c0_12 = arith.constant 0 : index
      %23 = vector.load %arg8[%c0_11, %c0_12] : memref<8x128xf32, #tpu.memory_space<vmem>>, vector<8x128xf32>
      %c3 = arith.constant 3 : index
      %24 = memref.load %arg3[%c3] : memref<8xf32, #tpu.memory_space<smem>>
      %25 = vector.broadcast %24 : f32 to vector<8x128xf32>
      %26 = arith.mulf %23, %25 : vector<8x128xf32>
      %c0_13 = arith.constant 0 : index
      %c0_14 = arith.constant 0 : index
      %27 = vector.load %arg6[%c0_13, %c0_14] : memref<1x128xf32, #tpu.memory_space<vmem>>, vector<1x128xf32>
      %28 = vector.broadcast %27 : vector<1x128xf32> to vector<8x128xf32>
      %29 = arith.addf %26, %28 : vector<8x128xf32>
      %c4 = arith.constant 4 : index
      %30 = memref.load %arg3[%c4] : memref<8xf32, #tpu.memory_space<smem>>
      %31 = vector.broadcast %30 : f32 to vector<8x128xf32>
      %32 = arith.mulf %29, %31 : vector<8x128xf32>
      %33 = math.roundeven %32 : vector<8x128xf32>
      %c5 = arith.constant 5 : index
      %34 = memref.load %arg3[%c5] : memref<8xf32, #tpu.memory_space<smem>>
      %c6 = arith.constant 6 : index
      %35 = memref.load %arg3[%c6] : memref<8xf32, #tpu.memory_space<smem>>
      %36 = vector.broadcast %34 : f32 to vector<8x128xf32>
      %37 = arith.maximumf %36, %33 : vector<8x128xf32>
      %38 = vector.broadcast %35 : f32 to vector<8x128xf32>
      %39 = arith.minimumf %38, %37 : vector<8x128xf32>
      %c7 = arith.constant 7 : index
      %40 = memref.load %arg3[%c7] : memref<8xf32, #tpu.memory_space<smem>>
      %41 = vector.broadcast %40 : f32 to vector<8x128xf32>
      %42 = arith.mulf %39, %41 : vector<8x128xf32>
      %c0_15 = arith.constant 0 : index
      %c0_16 = arith.constant 0 : index
      %43 = vector.load %arg7[%c0_15, %c0_16] : memref<8x128xf32, #tpu.memory_space<vmem>>, vector<8x128xf32>
      tpu.vector_store %arg7[%c0_15, %c0_16], %42 {strides = array<i32>} : memref<8x128xf32, #tpu.memory_space<vmem>>, vector<8x128xf32>,
    } else {
    }
    return
  }
  func.func @transform_0(%arg0: i32, %arg1: i32, %arg2: i32) -> i32 {
    %c0_i32 = arith.constant 0 : i32
    %c0_i32_0 = arith.constant 0 : i32
    return %c0_i32 : i32
  }
  func.func @transform_1(%arg0: i32, %arg1: i32, %arg2: i32) -> (i32, i32) {
    %c0_i32 = arith.constant 0 : i32
    return %arg0, %arg2 : i32, i32
  }
  func.func @transform_2(%arg0: i32, %arg1: i32, %arg2: i32) -> (i32, i32) {
    %c0_i32 = arith.constant 0 : i32
    return %arg2, %arg1 : i32, i32
  }
  func.func @transform_3(%arg0: i32, %arg1: i32, %arg2: i32) -> (i32, i32) {
    %c0_i32 = arith.constant 0 : i32
    %c0_i32_0 = arith.constant 0 : i32
    return %c0_i32, %arg1 : i32, i32
  }
  func.func @transform_4(%arg0: i32, %arg1: i32, %arg2: i32) -> (i32, i32) {
    %c0_i32 = arith.constant 0 : i32
    return %arg0, %arg1 : i32, i32
  }
}

</mosaic_0001>

<llo_original>
// kernel: tpu_custom_call.1
$region0: #{tpu_custom_call.1}
  #allocation0 [shape = 'u32[]', space=smem, size = 0x4, offset = 0x4, fixed_abs, tag = 'smem constant byte address 0x4 - core index']
  #allocation1 [shape = 'u32[144,128]{1,0:T(1,128)}', space=vmem, size = 0x12000, scoped, tag = 'internal scratch']
  #allocation2 [shape = 'f32[8,128]{1,0:T(8,128)}', space=vmem, size = 0x1000, scoped, tag = 'scratch operand']
  %s0 = inlined_call_operand.hbm [shape: f32[8], index: 0, kind: input, shape index: {}]
  %s1 = inlined_call_operand.hbm [shape: f32[8,128], index: 1, kind: input, shape index: {}]
  %s2 = inlined_call_operand.hbm [shape: bf16[128,128], index: 2, kind: input, shape index: {}]
  %s3 = inlined_call_operand.hbm [shape: f32[1,128], index: 3, kind: input, shape index: {}]
  %s4 = inlined_call_operand.hbm [shape: f32[8,128], index: 4, kind: output, shape index: {}]
  %s5 = sld [smem:[#allocation0]]
  $region50: #{tpu_custom_call.1} parent=0
    _
  %s7 = ssub.s32 1, %s5
  %s8 = scalar_select 0, %s7, %s5
  $region1: #{tpu_custom_call.1} parent=0
    #allocation3 [shape = 'u8[512]{0}', space=smem, size = 0x200, scoped, tag = 'input window, operand 0, single buffered']
    #allocation4 [shape = 's32[1]{0}', space=sflag, size = 0x4, scoped, tag = 'scoped memory for tpu_custom_call.1']
    #allocation5 [shape = 's32[1]{0}', space=sflag, size = 0x4, scoped, tag = 'scoped memory for tpu_custom_call.1']
    #allocation6 [shape = 's32[1]{0}', space=sflag, size = 0x4, scoped, tag = 'scoped memory for tpu_custom_call.1']
    #allocation7 [shape = 'u8[4096]{0}', space=vmem, size = 0x1000, scoped, tag = 'input window, operand 1, single buffered']
    #allocation8 [shape = 'u8[32768]{0}', space=vmem, size = 0x8000, scoped, tag = 'input window, operand 2, single buffered']
    #allocation9 [shape = 's32[1]{0}', space=sflag, size = 0x4, scoped, tag = 'scoped memory for tpu_custom_call.1']
    #allocation10 [shape = 'u8[512]{0}', space=vmem, size = 0x400, scoped, tag = 'input window, operand 3, single buffered']
    #allocation11 [shape = 'u8[4096]{0}', space=vmem, size = 0x1000, scoped, tag = 'output window, operand 0, single buffered']
    %9 = vsyncpa [#allocation6], 0
    %10 = vsyncpa [#allocation4], 0
    %11 = vsyncpa [#allocation9], 0
    %12 = vsyncpa [#allocation5], 0
    // Predicated region
    $region2: #{tpu_custom_call.1} parent=1 // pred_check
      _
    $region3: #{tpu_custom_call.1} parent=1 // pred_check_branch
      %14 = sbr.rel (0) target = $region5
    $region4: #{tpu_custom_call.1} parent=1 // pred_region
      %s16 = ssub.s32 16, 16
      %17 = vsyncadd [#allocation6], %s16
      %20 = dma.hbm_to_smem %s0, 16, [#allocation3], [#allocation6]
    $region5: #{tpu_custom_call.1} parent=1 // pred_fallthru
      _
    // Predicated region
    $region6: #{tpu_custom_call.1} parent=1 // pred_check
      _
    $region7: #{tpu_custom_call.1} parent=1 // pred_check_branch
      %22 = sbr.rel (0) target = $region9
    $region8: #{tpu_custom_call.1} parent=1 // pred_region
      %s24 = ssub.s32 128, 128
      %25 = vsyncadd [#allocation4], %s24
      %s27 = sshll.u32 [#allocation7], 4
      %s28 = int_to_ptr.vmem [resolvable:$true] %s27
      %30 = dma.hbm_to_vmem [thread:$0]  %s1, 128, %s28, [#allocation4]
    $region9: #{tpu_custom_call.1} parent=1 // pred_fallthru
      _
    // Predicated region
    $region10: #{tpu_custom_call.1} parent=1 // pred_check
      _
    $region11: #{tpu_custom_call.1} parent=1 // pred_check_branch
      %32 = sbr.rel (0) target = $region13
    $region12: #{tpu_custom_call.1} parent=1 // pred_region
      %s34 = ssub.s32 1024, 1024
      %35 = vsyncadd [#allocation9], %s34
      %s36 = sshll.u32 [#allocation8], 4
      %s37 = int_to_ptr.vmem [resolvable:$true] %s36
      %42 = dma.hbm_to_vmem [thread:$0]  %s2, 1024, %s37, [#allocation9], 64, 64, 4
    $region13: #{tpu_custom_call.1} parent=1 // pred_fallthru
      _
    // Predicated region
    $region14: #{tpu_custom_call.1} parent=1 // pred_check
      _
    $region15: #{tpu_custom_call.1} parent=1 // pred_check_branch
      %44 = sbr.rel (0) target = $region17
    $region16: #{tpu_custom_call.1} parent=1 // pred_region
      %s46 = ssub.s32 16, 16
      %47 = vsyncadd [#allocation9], %s46
      %s49 = sshll.u32 [#allocation10], 4
      %s50 = int_to_ptr.vmem [resolvable:$true] %s49
      %52 = dma.hbm_to_vmem [thread:$0]  %s3, 16, %s50, [#allocation9]
    $region17: #{tpu_custom_call.1} parent=1 // pred_fallthru
      _
    // Predicated region
    $region18: #{tpu_custom_call.1} parent=1 // pred_check
      _
    $region19: #{tpu_custom_call.1} parent=1 // pred_check_branch
      %54 = sbr.rel (0) target = $region21
    $region20: #{tpu_custom_call.1} parent=1 // pred_region
      %55 = dma.done [#allocation6], 16
    $region21: #{tpu_custom_call.1} parent=1 // pred_fallthru
      _
    // Predicated region
    $region22: #{tpu_custom_call.1} parent=1 // pred_check
      _
    $region23: #{tpu_custom_call.1} parent=1 // pred_check_branch
      %57 = sbr.rel (0) target = $region25
    $region24: #{tpu_custom_call.1} parent=1 // pred_region
      %58 = dma.done [#allocation4], 128
    $region25: #{tpu_custom_call.1} parent=1 // pred_fallthru
      _
    // Predicated region
    $region26: #{tpu_custom_call.1} parent=1 // pred_check
      _
    $region27: #{tpu_custom_call.1} parent=1 // pred_check_branch
      %60 = sbr.rel (0) target = $region29
    $region28: #{tpu_custom_call.1} parent=1 // pred_region
      %61 = dma.done [#allocation9], 1024
    $region29: #{tpu_custom_call.1} parent=1 // pred_fallthru
      _
    // Predicated region
    $region30: #{tpu_custom_call.1} parent=1 // pred_check
      _
    $region31: #{tpu_custom_call.1} parent=1 // pred_check_branch
      %63 = sbr.rel (0) target = $region33
    $region32: #{tpu_custom_call.1} parent=1 // pred_region
      %64 = dma.done [#allocation9], 16
    $region33: #{tpu_custom_call.1} parent=1 // pred_fallthru
      _
    %65 = sfence
    %p67 = scmp.eq.s32.totalorder 0, 0
    // Predicated region
    $region34: #{tpu_custom_call.1} parent=1 // pred_check
      %p68 = pneg %p67
    $region35: #{tpu_custom_call.1} parent=1 // pred_check_branch
      %70 = sbr.rel (%p68) target = $region37
    $region36: #{tpu_custom_call.1} parent=1 // pred_region
      %71 = vst [vmem:[#allocation2] sm:$0xff] 0.0
    $region37: #{tpu_custom_call.1} parent=1 // pred_fallthru
      _
    %v72 = vld [vmem:[#allocation7] sm:$0xff]
    %s73 = sld [smem:[#allocation3]]
    %v74 = vstv %s73
    %v75 = vmul.f32 %v72, %v74
    %v76 = vround.ne.pseudo %v75
    %s77 = sld [smem:[#allocation3 + $0x1]]
    %s78 = sld [smem:[#allocation3 + $0x2]]
    %v79 = vstv %s77
    %v80 = vmax.f32 %v79, %v76
    %v81 = vstv %s78
    %v82 = vmin.f32 %v81, %v80
    %v83 = vld [vmem:[#allocation2] sm:$0xff]
    %v84 = vpack.c.bf16 %v82, %v82
    %v85 = vld [vmem:[#allocation8] sm:$0xf]
    %v86 = vld [vmem:[#allocation8 + $0x4] sm:$0xf]
    %v87 = vld [vmem:[#allocation8 + $0x8] sm:$0xf]
    %v88 = vld [vmem:[#allocation8 + $0xc] sm:$0xf]
    %v89 = vld [vmem:[#allocation8 + $0x10] sm:$0xf]
    %v90 = vld [vmem:[#allocation8 + $0x14] sm:$0xf]
    %v91 = vld [vmem:[#allocation8 + $0x18] sm:$0xf]
    %v92 = vld [vmem:[#allocation8 + $0x1c] sm:$0xf]
    %v93 = vld [vmem:[#allocation8 + $0x20] sm:$0xf]
    %v94 = vld [vmem:[#allocation8 + $0x24] sm:$0xf]
    %v95 = vld [vmem:[#allocation8 + $0x28] sm:$0xf]
    %v96 = vld [vmem:[#allocation8 + $0x2c] sm:$0xf]
    %v97 = vld [vmem:[#allocation8 + $0x30] sm:$0xf]
    %v98 = vld [vmem:[#allocation8 + $0x34] sm:$0xf]
    %v99 = vld [vmem:[#allocation8 + $0x38] sm:$0xf]
    %v100 = vld [vmem:[#allocation8 + $0x3c] sm:$0xf]
    %v117 = vunpack.c.l.b16 %v85
    %v118 = vunpack.c.l.b16 %v86
    %v119 = vunpack.c.l.b16 %v87
    %v120 = vunpack.c.l.b16 %v88
    %v121 = vunpack.c.l.b16 %v89
    %v122 = vunpack.c.l.b16 %v90
    %v123 = vunpack.c.l.b16 %v91
    %v124 = vunpack.c.l.b16 %v92
    %v125 = vunpack.c.l.b16 %v93
    %v126 = vunpack.c.l.b16 %v94
    %v127 = vunpack.c.l.b16 %v95
    %v128 = vunpack.c.l.b16 %v96
    %v129 = vunpack.c.l.b16 %v97
    %v130 = vunpack.c.l.b16 %v98
    %v131 = vunpack.c.l.b16 %v99
    %v132 = vunpack.c.l.b16 %v100
    %v133 = vpack.c.b16 %v118, %v117
    %v134 = vpack.c.b16 %v120, %v119
    %v135 = vpack.c.b16 %v122, %v121
    %v136 = vpack.c.b16 %v124, %v123
    %v137 = vpack.c.b16 %v126, %v125
    %v138 = vpack.c.b16 %v128, %v127
    %v139 = vpack.c.b16 %v130, %v129
    %v140 = vpack.c.b16 %v132, %v131
    %149 = vmatprep.subr.bf16.mxu0 0
    %150 = vmatpush1.bf16.msra.mxu0 %v133
    %151 = vmatprep.subr.bf16.mxu0 0
    %152 = vmatpush1.bf16.msra.mxu0 %v134
    %153 = vmatprep.subr.bf16.mxu0 0
    %154 = vmatpush1.bf16.msra.mxu0 %v135
    %155 = vmatprep.subr.bf16.mxu0 0
    %156 = vmatpush1.bf16.msra.mxu0 %v136
    %157 = vmatprep.subr.bf16.mxu0 0
    %158 = vmatpush1.bf16.msra.mxu0 %v137
    %159 = vmatprep.subr.bf16.mxu0 0
    %160 = vmatpush1.bf16.msra.mxu0 %v138
    %161 = vmatprep.subr.bf16.mxu0 0
    %162 = vmatpush1.bf16.msra.mxu0 %v139
    %163 = vmatprep.subr.bf16.mxu0 0
    %164 = vmatpush1.bf16.msra.mxu0 %v140
    %165 = vmatprep.subr.bf16.mxu0 0
    %166 = vmatpush1.bf16.msra.mxu0 0
    %167 = vmatprep.subr.bf16.mxu0 0
    %168 = vmatpush1.bf16.msra.mxu0 0
    %169 = vmatprep.subr.bf16.mxu0 0
    %170 = vmatpush1.bf16.msra.mxu0 0
    %171 = vmatprep.subr.bf16.mxu0 0
    %172 = vmatpush1.bf16.msra.mxu0 0
    %173 = vmatprep.subr.bf16.mxu0 0
    %174 = vmatpush1.bf16.msra.mxu0 0
    %175 = vmatprep.subr.bf16.mxu0 0
    %176 = vmatpush1.bf16.msra.mxu0 0
    %177 = vmatprep.subr.bf16.mxu0 0
    %178 = vmatpush1.bf16.msra.mxu0 0
    %179 = vmatprep.subr.bf16.mxu0 0
    %180 = vmatpush1.bf16.msra.mxu0 0
    %181 = vmatprep.mubr.bf16.mxu0 0
    %182 = vmatmul.mubr.bf16.gmra.mrb[0].mxu0 %v84
    %v183 = vpop.f32.mrb[0].mxu0
    %v184 = vadd.f32 0.0, %v183
    %v185 = vpop.f32.mrb[0].mxu0
    %v186 = vpop.f32.mrb[0].mxu0
    %v187 = vpop.f32.mrb[0].mxu0
    %188 = vdwg.mxu0
    %v189 = vadd.f32 %v83, %v184
    %190 = vst [vmem:[#allocation2] sm:$0xff] %v189
    // Predicated region
    $region38: #{tpu_custom_call.1} parent=1 // pred_check
      %p191 = pneg %p67
    $region39: #{tpu_custom_call.1} parent=1 // pred_check_branch
      %193 = sbr.rel (%p191) target = $region41
    $region40: #{tpu_custom_call.1} parent=1 // pred_region
      %v194 = vld [vmem:[#allocation2] sm:$0xff]
      %s195 = sld [smem:[#allocation3 + $0x3]]
      %v196 = vstv %s195
      %v197 = vmul.f32 %v194, %v196
      %v198 = vld [vmem:[#allocation10] sm:$0x1]
      %v200 = vlaneseq
      %v201 = vshrl.u32 %v200, 7
      %v202 = vsub.s32 0, %v201
      %v203 = vrot.slane %v198, %v202
      %v205 = vadd.f32 %v197, %v203
      %s206 = sld [smem:[#allocation3 + $0x4]]
      %v207 = vstv %s206
      %v208 = vmul.f32 %v205, %v207
      %v209 = vround.ne.pseudo %v208
      %s210 = sld [smem:[#allocation3 + $0x5]]
      %s211 = sld [smem:[#allocation3 + $0x6]]
      %v212 = vstv %s210
      %v213 = vmax.f32 %v212, %v209
      %v214 = vstv %s211
      %v215 = vmin.f32 %v214, %v213
      %s216 = sld [smem:[#allocation3 + $0x7]]
      %v217 = vstv %s216
      %v218 = vmul.f32 %v215, %v217
      %219 = vst [vmem:[#allocation11] sm:$0xff] %v218
    $region41: #{tpu_custom_call.1} parent=1 // pred_fallthru
      _
    // Predicated region
    $region42: #{tpu_custom_call.1} parent=1 // pred_check
      _
    $region43: #{tpu_custom_call.1} parent=1 // pred_check_branch
      %221 = sbr.rel (0) target = $region45
    $region44: #{tpu_custom_call.1} parent=1 // pred_region
      %s223 = ssub.s32 128, 128
      %224 = vsyncadd [#allocation5], %s223
      %s226 = sshll.u32 [#allocation11], 4
      %s227 = int_to_ptr.vmem [resolvable:$true] %s226
      %229 = dma.vmem_to_hbm [thread:$0]  %s227, 128, %s4, [#allocation5]
    $region45: #{tpu_custom_call.1} parent=1 // pred_fallthru
      _
    // Predicated region
    $region46: #{tpu_custom_call.1} parent=1 // pred_check
      _
    $region47: #{tpu_custom_call.1} parent=1 // pred_check_branch
      %231 = sbr.rel (0) target = $region49
    $region48: #{tpu_custom_call.1} parent=1 // pred_region
      %232 = dma.done [#allocation5], 128
    $region49: #{tpu_custom_call.1} parent=1 // pred_fallthru
      _
    %233 = vsyncpa [#allocation4], 1
    %234 = vsyncpa [#allocation9], 1
    %235 = vsyncpa [#allocation5], 1
    %236 = vsyncpa [#allocation6], 1

</llo_original>
